<compile_context>
chip_gen: v7x
topology: tpu7x:2x2x1
jax: 0.10.0
libtpu: 0.0.40
codegen_flags: <defaults>
</compile_context>

<pallas_src>
import functools

import jax
import jax.numpy as jnp
from jax.experimental import pallas as pl
from jax.experimental.pallas import tpu as pltpu

LANES = 128


def _round_up(n, m):
    return ((n + m - 1) // m) * m


def ensemble_kernel(thr_ref, x_ref, w1_ref, b1_ref, w2_ref, b2_ref, out_ref,
                    *, num_models):
    """One grid step == one batch tile; all M models computed in one shot."""
    # Stage 1: lane-packed Linear + ReLU for every model at once.
    h = jnp.maximum(
        jnp.dot(x_ref[...], w1_ref[...], preferred_element_type=jnp.float32)
        + b1_ref[...],
        0.0,
    )
    # Stage 2: block-diagonal packed Linear -> per-model preds in lanes 0..M-1.
    p = jnp.dot(h, w2_ref[...], preferred_element_type=jnp.float32) + b2_ref[...]

    # Algorithm 2 cascade, fully in registers; single lane-1 store at the end.
    final = p[:, 0:1]
    for i in range(1, num_models):
        pi = p[:, i:i + 1]
        final = jnp.where(pi > thr_ref[i - 1], pi, final)
    out_ref[...] = final


def ensemble_forward(x, edge_label, w1, b1, w2, b2, thresholds):
    """Eval-mode forward of EnsembleModel: returns (final_pred, edge_label)."""
    M, H, _ = w1.shape
    B = x.shape[0]

    # ---- Pack the ensemble weights (one-time, wrapper side) ----------------
    P1 = _round_up(M * H, LANES)          # lane width of the hidden stage
    P2 = LANES                            # lane width of the prediction stage

    w1_cat = jnp.concatenate([w1[m] for m in range(M)], axis=1)      # [H, M*H]
    w1_cat = jnp.pad(w1_cat, ((0, 0), (0, P1 - M * H)))              # [H, P1]
    b1_cat = jnp.concatenate([b1[m] for m in range(M)], axis=1)      # [1, M*H]
    b1_cat = jnp.pad(b1_cat, ((0, 0), (0, P1 - M * H)))              # [1, P1]

    w2_blk = jnp.zeros((P1, P2), jnp.float32)                        # block-diag
    for m in range(M):
        w2_blk = w2_blk.at[m * H:(m + 1) * H, m].set(w2[m][:, 0])
    b2_row = jnp.zeros((1, P2), jnp.float32)
    b2_row = b2_row.at[0, :M].set(b2[:, 0, 0])

    # ---- Batch tiling (sublane-aligned; big tiles when B is large) ---------
    TB = min(512, _round_up(B, 8))
    B_pad = _round_up(B, TB)
    x_pad = x if B_pad == B else jnp.pad(x, ((0, B_pad - B), (0, 0)))

    kernel = functools.partial(ensemble_kernel, num_models=M)

    final_pred = pl.pallas_call(
        kernel,
        out_shape=jax.ShapeDtypeStruct((B_pad, 1), jnp.float32),
        grid_spec=pltpu.PrefetchScalarGridSpec(
            num_scalar_prefetch=1,                 # thresholds -> SMEM
            grid=(B_pad // TB,),
            in_specs=[
                pl.BlockSpec((TB, H), lambda b, thr: (b, 0)),   # x tile
                pl.BlockSpec((H, P1), lambda b, thr: (0, 0)),   # W1 packed (resident)
                pl.BlockSpec((1, P1), lambda b, thr: (0, 0)),   # b1 packed (resident)
                pl.BlockSpec((P1, P2), lambda b, thr: (0, 0)),  # W2 block-diag (resident)
                pl.BlockSpec((1, P2), lambda b, thr: (0, 0)),   # b2 row (resident)
            ],
            out_specs=pl.BlockSpec((TB, 1), lambda b, thr: (b, 0)),
        ),
        compiler_params=pltpu.CompilerParams(
            dimension_semantics=("parallel",),     # batch tiles are independent
        ),
    )(thresholds, x_pad, w1_cat, b1_cat, w2_blk, b2_row)

    if B_pad != B:
        final_pred = final_pred[:B]
    return final_pred, edge_label


def ref_forward(x, w1, b1, w2, b2, thresholds):
    """Pure-JAX reference of Algorithm 2 for correctness checking."""
    M = w1.shape[0]
    preds = []
    for m in range(M):
        h = jnp.maximum(x @ w1[m] + b1[m], 0.0)
        preds.append(h @ w2[m] + b2[m])
    final = preds[0]
    for i in range(1, M):
        final = jnp.where(preds[i] > thresholds[i - 1], preds[i], final)
    return final


if __name__ == "__main__":
    # Small shapes consistent with the module: hid_dim=32, batch of 8 edges,
    # thresholds=[0.5, 1.0] -> num_models = 3.
    B, H = 8, 32
    thresholds_list = [0.5, 1.0]
    M = len(thresholds_list) + 1

    key = jax.random.PRNGKey(0)
    kx, kl, k1, k2, k3, k4 = jax.random.split(key, 6)

    x = jax.random.normal(kx, (B, H), dtype=jnp.float32)
    edge_label = jax.random.normal(kl, (B,), dtype=jnp.float32)

    w1 = jax.random.normal(k1, (M, H, H), dtype=jnp.float32) * (1.0 / jnp.sqrt(H))
    b1 = jax.random.normal(k2, (M, 1, H), dtype=jnp.float32) * 0.1
    w2 = jax.random.normal(k3, (M, H, 1), dtype=jnp.float32) * (1.0 / jnp.sqrt(H))
    b2 = jax.random.normal(k4, (M, 1, 1), dtype=jnp.float32) * 0.1

    thresholds = jnp.asarray(thresholds_list, dtype=jnp.float32)

    final_pred, label_out = ensemble_forward(x, edge_label, w1, b1, w2, b2,
                                             thresholds)
    final_pred = jax.block_until_ready(final_pred)
    label_out = jax.block_until_ready(label_out)

    expected = ref_forward(x, w1, b1, w2, b2, thresholds)
    assert final_pred.shape == (B, 1)
    assert label_out.shape == edge_label.shape
    assert jnp.allclose(final_pred, expected, atol=1e-5, rtol=1e-5)
    assert jnp.allclose(label_out, edge_label)

    print("KERNEL_OK")
</pallas_src>

<mosaic_0001>
module attributes {stable_mosaic.version = 11 : i64} {
  func.func @ensemble_kernel(%arg0: i32, %arg1: memref<2xf32, #tpu.memory_space<smem>>, %arg2: memref<8x32xf32, #tpu.memory_space<vmem>>, %arg3: memref<32x128xf32, #tpu.memory_space<vmem>>, %arg4: memref<1x128xf32, #tpu.memory_space<vmem>>, %arg5: memref<128x128xf32, #tpu.memory_space<vmem>>, %arg6: memref<1x128xf32, #tpu.memory_space<vmem>>, %arg7: memref<8x1xf32, #tpu.memory_space<vmem>>) attributes {dimension_semantics = [#tpu.dimension_semantics<parallel>], iteration_bounds = array<i64: 1>, scalar_prefetch = 1 : i64, scratch_operands = 0 : i64, tpu.core_type = #tpu.core_type<tc>, window_params = [{transform_indices = @transform_0, window_bounds = array<i64: 8, 32>}, {pipeline_mode = #tpu.pipeline_mode<synchronous>, transform_indices = @transform_1, window_bounds = array<i64: 32, 128>}, {pipeline_mode = #tpu.pipeline_mode<synchronous>, transform_indices = @transform_2, window_bounds = array<i64: 1, 128>}, {pipeline_mode = #tpu.pipeline_mode<synchronous>, transform_indices = @transform_3, window_bounds = array<i64: 128, 128>}, {pipeline_mode = #tpu.pipeline_mode<synchronous>, transform_indices = @transform_4, window_bounds = array<i64: 1, 128>}, {transform_indices = @transform_5, window_bounds = array<i64: 8, 1>}]} {
    %c0 = arith.constant 0 : index
    %c0_0 = arith.constant 0 : index
    %0 = vector.load %arg2[%c0, %c0_0] : memref<8x32xf32, #tpu.memory_space<vmem>>, vector<8x32xf32>
    %c0_1 = arith.constant 0 : index
    %c0_2 = arith.constant 0 : index
    %1 = vector.load %arg3[%c0_1, %c0_2] : memref<32x128xf32, #tpu.memory_space<vmem>>, vector<32x128xf32>
    %cst = arith.constant dense<0.000000e+00> : vector<8x128xf32>
    %2 = tpu.matmul %0, %1, %cst {dimension_numbers = #tpu.dot_dimension_numbers<[1], [0], [0], [1], [0, 0, 1, 1], [], []>} : vector<8x32xf32>, vector<32x128xf32>, vector<8x128xf32> -> vector<8x128xf32>
    %c0_3 = arith.constant 0 : index
    %c0_4 = arith.constant 0 : index
    %3 = vector.load %arg4[%c0_3, %c0_4] : memref<1x128xf32, #tpu.memory_space<vmem>>, vector<1x128xf32>
    %4 = vector.broadcast %3 : vector<1x128xf32> to vector<8x128xf32>
    %5 = arith.addf %2, %4 : vector<8x128xf32>
    %cst_5 = arith.constant 0.000000e+00 : f32
    %6 = vector.broadcast %cst_5 : f32 to vector<8x128xf32>
    %7 = arith.maximumf %5, %6 : vector<8x128xf32>
    %c0_6 = arith.constant 0 : index
    %c0_7 = arith.constant 0 : index
    %8 = vector.load %arg5[%c0_6, %c0_7] : memref<128x128xf32, #tpu.memory_space<vmem>>, vector<128x128xf32>
    %cst_8 = arith.constant dense<0.000000e+00> : vector<8x128xf32>
    %9 = tpu.matmul %7, %8, %cst_8 {dimension_numbers = #tpu.dot_dimension_numbers<[1], [0], [0], [1], [0, 0, 1, 1], [], []>} : vector<8x128xf32>, vector<128x128xf32>, vector<8x128xf32> -> vector<8x128xf32>
    %c0_9 = arith.constant 0 : index
    %c0_10 = arith.constant 0 : index
    %10 = vector.load %arg6[%c0_9, %c0_10] : memref<1x128xf32, #tpu.memory_space<vmem>>, vector<1x128xf32>
    %11 = vector.broadcast %10 : vector<1x128xf32> to vector<8x128xf32>
    %12 = arith.addf %9, %11 : vector<8x128xf32>
    %13 = vector.extract_strided_slice %12 {offsets = [0, 0], sizes = [8, 1], strides = [1, 1]} : vector<8x128xf32> to vector<8x1xf32>
    %14 = vector.extract_strided_slice %12 {offsets = [0, 1], sizes = [8, 1], strides = [1, 1]} : vector<8x128xf32> to vector<8x1xf32>
    %c0_11 = arith.constant 0 : index
    %15 = memref.load %arg1[%c0_11] : memref<2xf32, #tpu.memory_space<smem>>
    %16 = vector.broadcast %15 : f32 to vector<8x1xf32>
    %17 = arith.cmpf ogt, %14, %16 : vector<8x1xf32>
    %18 = arith.select %17, %14, %13 : vector<8x1xi1>, vector<8x1xf32>
    %19 = vector.extract_strided_slice %12 {offsets = [0, 2], sizes = [8, 1], strides = [1, 1]} : vector<8x128xf32> to vector<8x1xf32>
    %c1 = arith.constant 1 : index
    %20 = memref.load %arg1[%c1] : memref<2xf32, #tpu.memory_space<smem>>
    %21 = vector.broadcast %20 : f32 to vector<8x1xf32>
    %22 = arith.cmpf ogt, %19, %21 : vector<8x1xf32>
    %23 = arith.select %22, %19, %18 : vector<8x1xi1>, vector<8x1xf32>
    %c0_12 = arith.constant 0 : index
    %c0_13 = arith.constant 0 : index
    %24 = vector.load %arg7[%c0_12, %c0_13] : memref<8x1xf32, #tpu.memory_space<vmem>>, vector<8x1xf32>
    tpu.vector_store %arg7[%c0_12, %c0_13], %23 {strides = array<i32>} : memref<8x1xf32, #tpu.memory_space<vmem>>, vector<8x1xf32>,
    return
  }
  func.func @transform_0(%arg0: i32, %arg1: memref<2xf32, #tpu.memory_space<smem>>) -> (i32, i32) {
    %c0_i32 = arith.constant 0 : i32
    %c0_i32_0 = arith.constant 0 : i32
    return %arg0, %c0_i32 : i32, i32
  }
  func.func @transform_1(%arg0: i32, %arg1: memref<2xf32, #tpu.memory_space<smem>>) -> (i32, i32) {
    %c0_i32 = arith.constant 0 : i32
    %c0_i32_0 = arith.constant 0 : i32
    %c0_i32_1 = arith.constant 0 : i32
    return %c0_i32, %c0_i32_0 : i32, i32
  }
  func.func @transform_2(%arg0: i32, %arg1: memref<2xf32, #tpu.memory_space<smem>>) -> (i32, i32) {
    %c0_i32 = arith.constant 0 : i32
    %c0_i32_0 = arith.constant 0 : i32
    %c0_i32_1 = arith.constant 0 : i32
    return %c0_i32, %c0_i32_0 : i32, i32
  }
  func.func @transform_3(%arg0: i32, %arg1: memref<2xf32, #tpu.memory_space<smem>>) -> (i32, i32) {
    %c0_i32 = arith.constant 0 : i32
    %c0_i32_0 = arith.constant 0 : i32
    %c0_i32_1 = arith.constant 0 : i32
    return %c0_i32, %c0_i32_0 : i32, i32
  }
  func.func @transform_4(%arg0: i32, %arg1: memref<2xf32, #tpu.memory_space<smem>>) -> (i32, i32) {
    %c0_i32 = arith.constant 0 : i32
    %c0_i32_0 = arith.constant 0 : i32
    %c0_i32_1 = arith.constant 0 : i32
    return %c0_i32, %c0_i32_0 : i32, i32
  }
  func.func @transform_5(%arg0: i32, %arg1: memref<2xf32, #tpu.memory_space<smem>>) -> (i32, i32) {
    %c0_i32 = arith.constant 0 : i32
    %c0_i32_0 = arith.constant 0 : i32
    return %arg0, %c0_i32 : i32, i32
  }
}

</mosaic_0001>

<llo_original>
// kernel: tpu_custom_call.1
$region0: #{tpu_custom_call.1}
  #allocation0 [shape = 'u32[]', space=smem, size = 0x4, offset = 0x4, fixed_abs, tag = 'smem constant byte address 0x4 - core index']
  #allocation1 [shape = 'u32[144,128]{1,0:T(1,128)}', space=vmem, size = 0x12000, scoped, tag = 'internal scratch']
  #allocation2 [shape = 's32[1]{0}', space=sflag, size = 0x4, scoped, tag = 'scoped memory for tpu_custom_call.1']
  #allocation3 [shape = 'u8[512]{0}', space=smem, size = 0x200, scoped, tag = 'prefetched SMEM operand 0']
  %s0 = inlined_call_operand.hbm [shape: f32[2], index: 0, kind: input, shape index: {}]
  %s1 = inlined_call_operand.hbm [shape: f32[8,32], index: 1, kind: input, shape index: {}]
  %s2 = inlined_call_operand.hbm [shape: f32[32,128], index: 2, kind: input, shape index: {}]
  %s3 = inlined_call_operand.vmem [shape: f32[1,128], index: 3, kind: input, shape index: {}]
  %s4 = inlined_call_operand.hbm [shape: f32[128,128], index: 4, kind: input, shape index: {}]
  %s5 = inlined_call_operand.vmem [shape: f32[1,128], index: 5, kind: input, shape index: {}]
  %s6 = inlined_call_operand.vmem [shape: f32[8,1], index: 6, kind: output, shape index: {}]
  %s7 = sld [smem:[#allocation0]]
  $region42: #{tpu_custom_call.1} parent=0
    _
  %s9 = ssub.s32 1, %s7
  %s10 = scalar_select 0, %s9, %s7
  %12 = dma.hbm_to_smem %s0, 16, [#allocation3], [#allocation2]
  %13 = dma.done [#allocation2], 16
  %14 = sfence
  $region1: #{tpu_custom_call.1} parent=0
    #allocation4 [shape = 'u8[4096]{0}', space=vmem, size = 0x1000, scoped, tag = 'input window, operand 1, single buffered']
    #allocation5 [shape = 's32[1]{0}', space=sflag, size = 0x4, scoped, tag = 'scoped memory for tpu_custom_call.1']
    #allocation6 [shape = 'u8[16384]{0}', space=vmem, size = 0x4000, scoped, tag = 'input window, operand 2, single buffered']
    #allocation7 [shape = 's32[1]{0}', space=sflag, size = 0x4, scoped, tag = 'scoped memory for tpu_custom_call.1']
    #allocation8 [shape = 'u8[65536]{0}', space=vmem, size = 0x10000, scoped, tag = 'input window, operand 4, single buffered']
    %15 = vsyncpa [#allocation5], 0
    %16 = vsyncpa [#allocation7], 0
    // Predicated region
    $region2: #{tpu_custom_call.1} parent=1 // pred_check
      _
    $region3: #{tpu_custom_call.1} parent=1 // pred_check_branch
      %18 = sbr.rel (0) target = $region5
    $region4: #{tpu_custom_call.1} parent=1 // pred_region
      %s20 = ssub.s32 128, 128
      %21 = vsyncadd [#allocation5], %s20
      %s23 = sshll.u32 [#allocation4], 4
      %s24 = int_to_ptr.vmem [resolvable:$true] %s23
      %26 = dma.hbm_to_vmem [thread:$0]  %s1, 128, %s24, [#allocation5]
    $region5: #{tpu_custom_call.1} parent=1 // pred_fallthru
      _
    // Predicated region
    $region6: #{tpu_custom_call.1} parent=1 // pred_check
      _
    $region7: #{tpu_custom_call.1} parent=1 // pred_check_branch
      %28 = sbr.rel (0) target = $region9
    $region8: #{tpu_custom_call.1} parent=1 // pred_region
      %s30 = ssub.s32 512, 512
      %31 = vsyncadd [#allocation7], %s30
      %s32 = sshll.u32 [#allocation6], 4
      %s33 = int_to_ptr.vmem [resolvable:$true] %s32
      %38 = dma.hbm_to_vmem [thread:$0]  %s2, 512, %s33, [#allocation7], 128, 128, 8
    $region9: #{tpu_custom_call.1} parent=1 // pred_fallthru
      _
    // Predicated region
    $region10: #{tpu_custom_call.1} parent=1 // pred_check
      _
    $region11: #{tpu_custom_call.1} parent=1 // pred_check_branch
      %40 = sbr.rel (0) target = $region13
    $region12: #{tpu_custom_call.1} parent=1 // pred_region
      _
    $region13: #{tpu_custom_call.1} parent=1 // pred_fallthru
      _
    // Predicated region
    $region14: #{tpu_custom_call.1} parent=1 // pred_check
      _
    $region15: #{tpu_custom_call.1} parent=1 // pred_check_branch
      %42 = sbr.rel (0) target = $region17
    $region16: #{tpu_custom_call.1} parent=1 // pred_region
      %s44 = ssub.s32 2048, 2048
      %45 = vsyncadd [#allocation7], %s44
      %s46 = sshll.u32 [#allocation8], 4
      %s47 = int_to_ptr.vmem [resolvable:$true] %s46
      %52 = dma.hbm_to_vmem [thread:$0]  %s4, 2048, %s47, [#allocation7], 128, 128, 8
    $region17: #{tpu_custom_call.1} parent=1 // pred_fallthru
      _
    // Predicated region
    $region18: #{tpu_custom_call.1} parent=1 // pred_check
      _
    $region19: #{tpu_custom_call.1} parent=1 // pred_check_branch
      %54 = sbr.rel (0) target = $region21
    $region20: #{tpu_custom_call.1} parent=1 // pred_region
      _
    $region21: #{tpu_custom_call.1} parent=1 // pred_fallthru
      _
    // Predicated region
    $region22: #{tpu_custom_call.1} parent=1 // pred_check
      _
    $region23: #{tpu_custom_call.1} parent=1 // pred_check_branch
      %56 = sbr.rel (0) target = $region25
    $region24: #{tpu_custom_call.1} parent=1 // pred_region
      %57 = dma.done [#allocation5], 128
    $region25: #{tpu_custom_call.1} parent=1 // pred_fallthru
      _
    // Predicated region
    $region26: #{tpu_custom_call.1} parent=1 // pred_check
      _
    $region27: #{tpu_custom_call.1} parent=1 // pred_check_branch
      %59 = sbr.rel (0) target = $region29
    $region28: #{tpu_custom_call.1} parent=1 // pred_region
      %60 = dma.done [#allocation7], 512
    $region29: #{tpu_custom_call.1} parent=1 // pred_fallthru
      _
    // Predicated region
    $region30: #{tpu_custom_call.1} parent=1 // pred_check
      _
    $region31: #{tpu_custom_call.1} parent=1 // pred_check_branch
      %62 = sbr.rel (0) target = $region33
    $region32: #{tpu_custom_call.1} parent=1 // pred_region
      %63 = dma.done [#allocation7], 2048
    $region33: #{tpu_custom_call.1} parent=1 // pred_fallthru
      _
    %v64 = vld [vmem:[#allocation4] sm:$0xff]
    %v65 = vld [vmem:[#allocation6] sm:$0xff]
    %v66 = vld [vmem:[#allocation6 + $0x8] sm:$0xff]
    %v67 = vld [vmem:[#allocation6 + $0x10] sm:$0xff]
    %v68 = vld [vmem:[#allocation6 + $0x18] sm:$0xff]
    %v69 = vld [vmem:[%s3] sm:$0x1]
    %v71 = vlaneseq
    %v72 = vshrl.u32 %v71, 7
    %v73 = vsub.s32 0, %v72
    %v74 = vrot.slane %v69, %v73
    %vm76 = vcmask 261120
    %v78 = vsel %vm76, %v64, 0
    %80 = vmatprep.subr.mxu0 0.0
    %81 = vmatpush1.msra.mxu0 %v65
    %82 = vmatprep.subr.mxu0 0.0
    %83 = vmatpush1.msra.mxu0 %v66
    %84 = vmatprep.subr.mxu0 0.0
    %85 = vmatpush1.msra.mxu0 %v67
    %86 = vmatprep.subr.mxu0 0.0
    %87 = vmatpush1.msra.mxu0 %v68
    %88 = vmatprep.subr.mxu0 0.0
    %89 = vmatpush1.msra.mxu0 0.0
    %90 = vmatprep.subr.mxu0 0.0
    %91 = vmatpush1.msra.mxu0 0.0
    %92 = vmatprep.subr.mxu0 0.0
    %93 = vmatpush1.msra.mxu0 0.0
    %94 = vmatprep.subr.mxu0 0.0
    %95 = vmatpush1.msra.mxu0 0.0
    %96 = vmatprep.subr.mxu0 0.0
    %97 = vmatpush1.msra.mxu0 0.0
    %98 = vmatprep.subr.mxu0 0.0
    %99 = vmatpush1.msra.mxu0 0.0
    %100 = vmatprep.subr.mxu0 0.0
    %101 = vmatpush1.msra.mxu0 0.0
    %102 = vmatprep.subr.mxu0 0.0
    %103 = vmatpush1.msra.mxu0 0.0
    %104 = vmatprep.subr.mxu0 0.0
    %105 = vmatpush1.msra.mxu0 0.0
    %106 = vmatprep.subr.mxu0 0.0
    %107 = vmatpush1.msra.mxu0 0.0
    %108 = vmatprep.subr.mxu0 0.0
    %109 = vmatpush1.msra.mxu0 0.0
    %110 = vmatprep.subr.mxu0 0.0
    %111 = vmatpush1.msra.mxu0 0.0
    %112 = vmatprep.subr.mxu0 0.0
    %113 = vmatpush1.msra.mxu0 0.0
    %114 = vmatprep.subr.mxu0 0.0
    %115 = vmatpush1.msra.mxu0 0.0
    %116 = vmatprep.subr.mxu0 0.0
    %117 = vmatpush1.msra.mxu0 0.0
    %118 = vmatprep.subr.mxu0 0.0
    %119 = vmatpush1.msra.mxu0 0.0
    %120 = vmatprep.subr.mxu0 0.0
    %121 = vmatpush1.msra.mxu0 0.0
    %122 = vmatprep.subr.mxu0 0.0
    %123 = vmatpush1.msra.mxu0 0.0
    %124 = vmatprep.subr.mxu0 0.0
    %125 = vmatpush1.msra.mxu0 0.0
    %126 = vmatprep.subr.mxu0 0.0
    %127 = vmatpush1.msra.mxu0 0.0
    %128 = vmatprep.subr.mxu0 0.0
    %129 = vmatpush1.msra.mxu0 0.0
    %130 = vmatprep.subr.mxu0 0.0
    %131 = vmatpush1.msra.mxu0 0.0
    %132 = vmatprep.subr.mxu0 0.0
    %133 = vmatpush1.msra.mxu0 0.0
    %134 = vmatprep.subr.mxu0 0.0
    %135 = vmatpush1.msra.mxu0 0.0
    %136 = vmatprep.subr.mxu0 0.0
    %137 = vmatpush1.msra.mxu0 0.0
    %138 = vmatprep.subr.mxu0 0.0
    %139 = vmatpush1.msra.mxu0 0.0
    %140 = vmatprep.subr.mxu0 0.0
    %141 = vmatpush1.msra.mxu0 0.0
    %142 = vmatprep.subr.mxu0 0.0
    %143 = vmatpush1.msra.mxu0 0.0
    %144 = vmatprep.mubr.f32.mxu0 0.0
    %145 = vmatmul.mubr.f32.gmra.mrb[0].mxu0 %v78
    %v146 = vpop.f32.mrb[0].mxu0
    %v147 = vadd.f32 %v74, %v146
    %v148 = vpop.f32.mrb[0].mxu0
    %149 = vdwg.mxu0
    %v150 = vmax.f32 %v147, 0.0
    %v151 = vld [vmem:[#allocation8] sm:$0xff]
    %v152 = vld [vmem:[#allocation8 + $0x8] sm:$0xff]
    %v153 = vld [vmem:[#allocation8 + $0x10] sm:$0xff]
    %v154 = vld [vmem:[#allocation8 + $0x18] sm:$0xff]
    %v155 = vld [vmem:[#allocation8 + $0x20] sm:$0xff]
    %v156 = vld [vmem:[#allocation8 + $0x28] sm:$0xff]
    %v157 = vld [vmem:[#allocation8 + $0x30] sm:$0xff]
    %v158 = vld [vmem:[#allocation8 + $0x38] sm:$0xff]
    %v159 = vld [vmem:[#allocation8 + $0x40] sm:$0xff]
    %v160 = vld [vmem:[#allocation8 + $0x48] sm:$0xff]
    %v161 = vld [vmem:[#allocation8 + $0x50] sm:$0xff]
    %v162 = vld [vmem:[#allocation8 + $0x58] sm:$0xff]
    %v163 = vld [vmem:[#allocation8 + $0x60] sm:$0xff]
    %v164 = vld [vmem:[#allocation8 + $0x68] sm:$0xff]
    %v165 = vld [vmem:[#allocation8 + $0x70] sm:$0xff]
    %v166 = vld [vmem:[#allocation8 + $0x78] sm:$0xff]
    %v167 = vld [vmem:[%s5] sm:$0x1]
    %v169 = vlaneseq
    %v170 = vshrl.u32 %v169, 7
    %v171 = vsub.s32 0, %v170
    %v172 = vrot.slane %v167, %v171
    %174 = vmatprep.subr.mxu0 0.0
    %175 = vmatpush1.msra.mxu0 %v151
    %176 = vmatprep.subr.mxu0 0.0
    %177 = vmatpush1.msra.mxu0 %v152
    %178 = vmatprep.subr.mxu0 0.0
    %179 = vmatpush1.msra.mxu0 %v153
    %180 = vmatprep.subr.mxu0 0.0
    %181 = vmatpush1.msra.mxu0 %v154
    %182 = vmatprep.subr.mxu0 0.0
    %183 = vmatpush1.msra.mxu0 %v155
    %184 = vmatprep.subr.mxu0 0.0
    %185 = vmatpush1.msra.mxu0 %v156
    %186 = vmatprep.subr.mxu0 0.0
    %187 = vmatpush1.msra.mxu0 %v157
    %188 = vmatprep.subr.mxu0 0.0
    %189 = vmatpush1.msra.mxu0 %v158
    %190 = vmatprep.subr.mxu0 0.0
    %191 = vmatpush1.msra.mxu0 %v159
    %192 = vmatprep.subr.mxu0 0.0
    %193 = vmatpush1.msra.mxu0 %v160
    %194 = vmatprep.subr.mxu0 0.0
    %195 = vmatpush1.msra.mxu0 %v161
    %196 = vmatprep.subr.mxu0 0.0
    %197 = vmatpush1.msra.mxu0 %v162
    %198 = vmatprep.subr.mxu0 0.0
    %199 = vmatpush1.msra.mxu0 %v163
    %200 = vmatprep.subr.mxu0 0.0
    %201 = vmatpush1.msra.mxu0 %v164
    %202 = vmatprep.subr.mxu0 0.0
    %203 = vmatpush1.msra.mxu0 %v165
    %204 = vmatprep.subr.mxu0 0.0
    %205 = vmatpush1.msra.mxu0 %v166
    %206 = vmatprep.subr.mxu0 0.0
    %207 = vmatpush1.msra.mxu0 0.0
    %208 = vmatprep.subr.mxu0 0.0
    %209 = vmatpush1.msra.mxu0 0.0
    %210 = vmatprep.subr.mxu0 0.0
    %211 = vmatpush1.msra.mxu0 0.0
    %212 = vmatprep.subr.mxu0 0.0
    %213 = vmatpush1.msra.mxu0 0.0
    %214 = vmatprep.subr.mxu0 0.0
    %215 = vmatpush1.msra.mxu0 0.0
    %216 = vmatprep.subr.mxu0 0.0
    %217 = vmatpush1.msra.mxu0 0.0
    %218 = vmatprep.subr.mxu0 0.0
    %219 = vmatpush1.msra.mxu0 0.0
    %220 = vmatprep.subr.mxu0 0.0
    %221 = vmatpush1.msra.mxu0 0.0
    %222 = vmatprep.subr.mxu0 0.0
    %223 = vmatpush1.msra.mxu0 0.0
    %224 = vmatprep.subr.mxu0 0.0
    %225 = vmatpush1.msra.mxu0 0.0
    %226 = vmatprep.subr.mxu0 0.0
    %227 = vmatpush1.msra.mxu0 0.0
    %228 = vmatprep.subr.mxu0 0.0
    %229 = vmatpush1.msra.mxu0 0.0
    %230 = vmatprep.subr.mxu0 0.0
    %231 = vmatpush1.msra.mxu0 0.0
    %232 = vmatprep.subr.mxu0 0.0
    %233 = vmatpush1.msra.mxu0 0.0
    %234 = vmatprep.subr.mxu0 0.0
    %235 = vmatpush1.msra.mxu0 0.0
    %236 = vmatprep.subr.mxu0 0.0
    %237 = vmatpush1.msra.mxu0 0.0
    %238 = vmatprep.mubr.f32.mxu0 0.0
    %239 = vmatmul.mubr.f32.gmra.mrb[0].mxu0 %v150
    %v240 = vpop.f32.mrb[0].mxu0
    %v241 = vadd.f32 %v172, %v240
    %v242 = vpop.f32.mrb[0].mxu0
    %243 = vdwg.mxu0
    %s244 = sld [smem:[#allocation3]]
    %v245 = vstv %s244
    %vm246 = vcmp.gt.f32.partialorder %v241, %v245
    %248 = vrot.lane.b32.xlu0 %v241, 1
    %v249 = vpop.permute.xlu0 %248
    %v251 = vsel %vm246, %v241, %v249
    %s252 = sld [smem:[#allocation3 + $0x1]]
    %v253 = vstv %s252
    %vm254 = vcmp.gt.f32.partialorder %v241, %v253
    %256 = vrot.lane.b32.xlu0 %v251, 1
    %v257 = vpop.permute.xlu0 %256
    %v259 = vsel %vm254, %v241, %v257
    %261 = vrot.lane.b32.xlu0 %v259, 126
    %v262 = vpop.permute.xlu0 %261
    %vm264 = vcmask 7168
    %265 = vst.msk [vmem:[%s6] sm:$0xff] %vm264, %v262
    // Predicated region
    $region34: #{tpu_custom_call.1} parent=1 // pred_check
      _
    $region35: #{tpu_custom_call.1} parent=1 // pred_check_branch
      %267 = sbr.rel (0) target = $region37
    $region36: #{tpu_custom_call.1} parent=1 // pred_region
      _
    $region37: #{tpu_custom_call.1} parent=1 // pred_fallthru
      _
    // Predicated region
    $region38: #{tpu_custom_call.1} parent=1 // pred_check
      _
    $region39: #{tpu_custom_call.1} parent=1 // pred_check_branch
      %269 = sbr.rel (0) target = $region41
    $region40: #{tpu_custom_call.1} parent=1 // pred_region
      _
    $region41: #{tpu_custom_call.1} parent=1 // pred_fallthru
      _
    %270 = vsyncpa [#allocation5], 1
    %271 = vsyncpa [#allocation7], 1

</llo_original>
